<compile_context>
chip_gen: v6e
topology: v6e:2x2x1
jax: 0.10.0
libtpu: 0.0.40
codegen_flags: <defaults>
</compile_context>

<pallas_src>
import jax
import jax.numpy as jnp
from jax.experimental import pallas as pl
from jax.experimental.pallas import tpu as pltpu

_LANE = 128          # TPU lane width
_MAX_TILE_N = 4096   # cap on lane-tile size (activation slab ~1 MiB f32 at H=64)


def _mlp_kernel(x_ref, w1_ref, b1_ref, w2_ref, b2_ref, w3_ref, b3_ref,
                w4_ref, b4_ref, o_ref):
    """Runs one (2, tile_n) column-block of collocation points through the MLP."""
    x = x_ref[...]                            # (2, tile_n) f32, lane-dense
    x0 = x[0:1, :]
    x1 = x[1:2, :]

    # Layer 1 (K=2): two VPU broadcast multiplies + add; cheaper than an MXU push.
    w1 = w1_ref[...]                          # (H, 2) f32
    h = jnp.tanh(w1[:, 0:1] * x0 + w1[:, 1:2] * x1 + b1_ref[...])   # (H, tile_n)

    # Layers 2 & 3 (HxH): bf16 MXU operands, f32 accumulation; bias/tanh in f32.
    h = jnp.tanh(
        jnp.dot(w2_ref[...], h.astype(jnp.bfloat16),
                preferred_element_type=jnp.float32) + b2_ref[...])
    h = jnp.tanh(
        jnp.dot(w3_ref[...], h.astype(jnp.bfloat16),
                preferred_element_type=jnp.float32) + b3_ref[...])

    # Output layer (M=1): VPU multiply + XLU sublane reduce -> lane-dense (1, tile_n).
    o_ref[...] = (jnp.sum(w4_ref[...] * h, axis=0, keepdims=True)
                  + b4_ref[...]).astype(o_ref.dtype)


def _round_up(x, m):
    return ((x + m - 1) // m) * m


def _choose_tile_n(n):
    """Pick a lane-dense tile so the grid has ~2 steps (both v7x TCs busy)."""
    n_aligned = _round_up(n, _LANE)
    if n_aligned <= _LANE:
        return _LANE
    if n_aligned <= 2 * _MAX_TILE_N:
        return _round_up(n_aligned // 2, _LANE)   # aim for exactly 2 grid steps
    return _MAX_TILE_N


@jax.jit
def laplace_net_forward_fm(x_fm, params):
    """Feature-major forward (no HBM transposes): x_fm (2, N) f32 -> (1, N) f32."""
    two, n = x_fm.shape
    assert two == 2
    h_dim = params["w1"].shape[0]

    tile_n = _choose_tile_n(n)
    n_pad = _round_up(max(n, tile_n), tile_n)
    if n_pad != n:
        x_fm = jnp.pad(x_fm, ((0, 0), (0, n_pad - n)))

    # Weights stay in PyTorch (out, in) orientation; kernel computes W @ h + b.
    w1 = params["w1"].astype(jnp.float32)                  # (H, 2)
    w2 = params["w2"].astype(jnp.bfloat16)                 # (H, H)  MXU operand
    w3 = params["w3"].astype(jnp.bfloat16)                 # (H, H)  MXU operand
    w4 = params["w4"].reshape(h_dim, 1).astype(jnp.float32)
    b1 = params["b1"].reshape(h_dim, 1).astype(jnp.float32)
    b2 = params["b2"].reshape(h_dim, 1).astype(jnp.float32)
    b3 = params["b3"].reshape(h_dim, 1).astype(jnp.float32)
    b4 = params["b4"].reshape(1, 1).astype(jnp.float32)

    grid = (n_pad // tile_n,)
    full = lambda shape: pl.BlockSpec(shape, lambda i: (0, 0))

    out = pl.pallas_call(
        _mlp_kernel,
        out_shape=jax.ShapeDtypeStruct((1, n_pad), jnp.float32),
        grid_spec=pltpu.PrefetchScalarGridSpec(
            num_scalar_prefetch=0,
            grid=grid,
            in_specs=[
                pl.BlockSpec((2, tile_n), lambda i: (0, i)),   # x tile (lane-dense)
                full((h_dim, 2)), full((h_dim, 1)),            # layer 1
                full((h_dim, h_dim)), full((h_dim, 1)),        # layer 2
                full((h_dim, h_dim)), full((h_dim, 1)),        # layer 3
                full((h_dim, 1)), full((1, 1)),                # output layer
            ],
            out_specs=pl.BlockSpec((1, tile_n), lambda i: (0, i)),
        ),
        compiler_params=pltpu.CompilerParams(
            dimension_semantics=("parallel",)),
    )(x_fm, w1, b1, w2, b2, w3, b3, w4, b4)

    return out[:, :n]


def laplace_net_forward(x, params):
    """PyTorch-convention forward: x (N, 2) -> (N, 1)."""
    return laplace_net_forward_fm(x.T, params).T


def init_params(key, hidden_dim=64):
    """Mimics PyTorch nn.Linear default init (uniform +/- 1/sqrt(fan_in))."""
    dims = [(hidden_dim, 2), (hidden_dim, hidden_dim),
            (hidden_dim, hidden_dim), (1, hidden_dim)]
    params = {}
    for idx, (out_d, in_d) in enumerate(dims, start=1):
        key, kw, kb = jax.random.split(key, 3)
        bound = 1.0 / jnp.sqrt(in_d)
        params[f"w{idx}"] = jax.random.uniform(
            kw, (out_d, in_d), jnp.float32, -bound, bound)
        params[f"b{idx}"] = jax.random.uniform(
            kb, (out_d,), jnp.float32, -bound, bound)
    return params


def _reference_f32(x, p):
    h = jnp.tanh(x @ p["w1"].T + p["b1"])
    h = jnp.tanh(h @ p["w2"].T + p["b2"])
    h = jnp.tanh(h @ p["w3"].T + p["b3"])
    return h @ p["w4"].T + p["b4"]


def _reference_mixed(x, p):
    """Mirrors the kernel numerics: f32 layer 1/output, bf16 MXU operands for 2&3."""
    w1 = p["w1"]
    h = jnp.tanh(x[:, 0:1] * w1[:, 0] + x[:, 1:2] * w1[:, 1] + p["b1"])
    h = jnp.tanh(jnp.dot(h.astype(jnp.bfloat16), p["w2"].T.astype(jnp.bfloat16),
                         preferred_element_type=jnp.float32) + p["b2"])
    h = jnp.tanh(jnp.dot(h.astype(jnp.bfloat16), p["w3"].T.astype(jnp.bfloat16),
                         preferred_element_type=jnp.float32) + p["b3"])
    return jnp.sum(h * p["w4"], axis=1, keepdims=True) + p["b4"]


if __name__ == "__main__":
    key = jax.random.PRNGKey(0)
    kx, kp = jax.random.split(key)

    hidden_dim = 64          # matches the PyTorch module default
    n_points = 300           # deliberately ragged (exercises pad + 2-step grid)
    x = jax.random.uniform(kx, (n_points, 2), jnp.float32, -1.0, 1.0)
    params = init_params(kp, hidden_dim=hidden_dim)

    out = jax.block_until_ready(laplace_net_forward(x, params))
    assert out.shape == (n_points, 1), out.shape

    # Transpose-free feature-major entry point gives identical results.
    out_fm = jax.block_until_ready(laplace_net_forward_fm(x.T, params))
    assert out_fm.shape == (1, n_points), out_fm.shape
    assert jnp.allclose(out, out_fm.T)

    ref_mixed = _reference_mixed(x, params)
    ref_f32 = _reference_f32(x, params)
    assert jnp.allclose(out, ref_mixed, atol=5e-3, rtol=5e-3), (
        float(jnp.max(jnp.abs(out - ref_mixed))))
    assert jnp.allclose(out, ref_f32, atol=5e-2, rtol=5e-2), (
        float(jnp.max(jnp.abs(out - ref_f32))))

    print("KERNEL_OK")
</pallas_src>

<mosaic_0001>
module attributes {stable_mosaic.version = 11 : i64} {
  func.func @_mlp_kernel(%arg0: i32, %arg1: memref<2x256xf32, #tpu.memory_space<vmem>>, %arg2: memref<64x2xf32, #tpu.memory_space<vmem>>, %arg3: memref<64x1xf32, #tpu.memory_space<vmem>>, %arg4: memref<64x64xbf16, #tpu.memory_space<vmem>>, %arg5: memref<64x1xf32, #tpu.memory_space<vmem>>, %arg6: memref<64x64xbf16, #tpu.memory_space<vmem>>, %arg7: memref<64x1xf32, #tpu.memory_space<vmem>>, %arg8: memref<64x1xf32, #tpu.memory_space<vmem>>, %arg9: memref<1x1xf32, #tpu.memory_space<vmem>>, %arg10: memref<1x256xf32, #tpu.memory_space<vmem>>) attributes {dimension_semantics = [#tpu.dimension_semantics<parallel>], iteration_bounds = array<i64: 2>, scalar_prefetch = 0 : i64, scratch_operands = 0 : i64, tpu.core_type = #tpu.core_type<tc>, window_params = [{transform_indices = @transform_0, window_bounds = array<i64: 2, 256>}, {pipeline_mode = #tpu.pipeline_mode<synchronous>, transform_indices = @transform_1, window_bounds = array<i64: 64, 2>}, {pipeline_mode = #tpu.pipeline_mode<synchronous>, transform_indices = @transform_2, window_bounds = array<i64: 64, 1>}, {pipeline_mode = #tpu.pipeline_mode<synchronous>, transform_indices = @transform_3, window_bounds = array<i64: 64, 64>}, {pipeline_mode = #tpu.pipeline_mode<synchronous>, transform_indices = @transform_4, window_bounds = array<i64: 64, 1>}, {pipeline_mode = #tpu.pipeline_mode<synchronous>, transform_indices = @transform_5, window_bounds = array<i64: 64, 64>}, {pipeline_mode = #tpu.pipeline_mode<synchronous>, transform_indices = @transform_6, window_bounds = array<i64: 64, 1>}, {pipeline_mode = #tpu.pipeline_mode<synchronous>, transform_indices = @transform_7, window_bounds = array<i64: 64, 1>}, {pipeline_mode = #tpu.pipeline_mode<synchronous>, transform_indices = @transform_8, window_bounds = array<i64: 1, 1>}, {transform_indices = @transform_9, window_bounds = array<i64: 1, 256>}]} {
    %c0 = arith.constant 0 : index
    %c0_0 = arith.constant 0 : index
    %0 = vector.load %arg1[%c0, %c0_0] : memref<2x256xf32, #tpu.memory_space<vmem>>, vector<2x256xf32>
    %1 = vector.extract_strided_slice %0 {offsets = [0, 0], sizes = [1, 256], strides = [1, 1]} : vector<2x256xf32> to vector<1x256xf32>
    %2 = vector.extract_strided_slice %0 {offsets = [1, 0], sizes = [1, 256], strides = [1, 1]} : vector<2x256xf32> to vector<1x256xf32>
    %c0_1 = arith.constant 0 : index
    %c0_2 = arith.constant 0 : index
    %3 = vector.load %arg2[%c0_1, %c0_2] : memref<64x2xf32, #tpu.memory_space<vmem>>, vector<64x2xf32>
    %4 = vector.extract_strided_slice %3 {offsets = [0, 0], sizes = [64, 1], strides = [1, 1]} : vector<64x2xf32> to vector<64x1xf32>
    %5 = vector.broadcast %4 : vector<64x1xf32> to vector<64x256xf32>
    %6 = vector.broadcast %1 : vector<1x256xf32> to vector<64x256xf32>
    %7 = arith.mulf %5, %6 : vector<64x256xf32>
    %8 = vector.extract_strided_slice %3 {offsets = [0, 1], sizes = [64, 1], strides = [1, 1]} : vector<64x2xf32> to vector<64x1xf32>
    %9 = vector.broadcast %8 : vector<64x1xf32> to vector<64x256xf32>
    %10 = vector.broadcast %2 : vector<1x256xf32> to vector<64x256xf32>
    %11 = arith.mulf %9, %10 : vector<64x256xf32>
    %12 = arith.addf %7, %11 : vector<64x256xf32>
    %c0_3 = arith.constant 0 : index
    %c0_4 = arith.constant 0 : index
    %13 = vector.load %arg3[%c0_3, %c0_4] : memref<64x1xf32, #tpu.memory_space<vmem>>, vector<64x1xf32>
    %14 = vector.broadcast %13 : vector<64x1xf32> to vector<64x256xf32>
    %15 = arith.addf %12, %14 : vector<64x256xf32>
    %16 = math.tanh %15 : vector<64x256xf32>
    %c0_5 = arith.constant 0 : index
    %c0_6 = arith.constant 0 : index
    %17 = vector.load %arg4[%c0_5, %c0_6] : memref<64x64xbf16, #tpu.memory_space<vmem>>, vector<64x64xbf16>
    %18 = arith.truncf %16 : vector<64x256xf32> to vector<64x256xbf16>
    %cst = arith.constant dense<0.000000e+00> : vector<64x256xf32>
    %19 = tpu.matmul %17, %18, %cst {dimension_numbers = #tpu.dot_dimension_numbers<[1], [0], [0], [1], [0, 0, 1, 1], [], []>} : vector<64x64xbf16>, vector<64x256xbf16>, vector<64x256xf32> -> vector<64x256xf32>
    %c0_7 = arith.constant 0 : index
    %c0_8 = arith.constant 0 : index
    %20 = vector.load %arg5[%c0_7, %c0_8] : memref<64x1xf32, #tpu.memory_space<vmem>>, vector<64x1xf32>
    %21 = vector.broadcast %20 : vector<64x1xf32> to vector<64x256xf32>
    %22 = arith.addf %19, %21 : vector<64x256xf32>
    %23 = math.tanh %22 : vector<64x256xf32>
    %c0_9 = arith.constant 0 : index
    %c0_10 = arith.constant 0 : index
    %24 = vector.load %arg6[%c0_9, %c0_10] : memref<64x64xbf16, #tpu.memory_space<vmem>>, vector<64x64xbf16>
    %25 = arith.truncf %23 : vector<64x256xf32> to vector<64x256xbf16>
    %cst_11 = arith.constant dense<0.000000e+00> : vector<64x256xf32>
    %26 = tpu.matmul %24, %25, %cst_11 {dimension_numbers = #tpu.dot_dimension_numbers<[1], [0], [0], [1], [0, 0, 1, 1], [], []>} : vector<64x64xbf16>, vector<64x256xbf16>, vector<64x256xf32> -> vector<64x256xf32>
    %c0_12 = arith.constant 0 : index
    %c0_13 = arith.constant 0 : index
    %27 = vector.load %arg7[%c0_12, %c0_13] : memref<64x1xf32, #tpu.memory_space<vmem>>, vector<64x1xf32>
    %28 = vector.broadcast %27 : vector<64x1xf32> to vector<64x256xf32>
    %29 = arith.addf %26, %28 : vector<64x256xf32>
    %30 = math.tanh %29 : vector<64x256xf32>
    %c0_14 = arith.constant 0 : index
    %c0_15 = arith.constant 0 : index
    %31 = vector.load %arg8[%c0_14, %c0_15] : memref<64x1xf32, #tpu.memory_space<vmem>>, vector<64x1xf32>
    %32 = vector.broadcast %31 : vector<64x1xf32> to vector<64x256xf32>
    %33 = arith.mulf %32, %30 : vector<64x256xf32>
    %cst_16 = arith.constant dense<0.000000e+00> : vector<256xf32>
    %34 = vector.multi_reduction <add>, %33, %cst_16 [0] : vector<64x256xf32> to vector<256xf32>
    %35 = vector.shape_cast %34 : vector<256xf32> to vector<1x256xf32>
    %c0_17 = arith.constant 0 : index
    %c0_18 = arith.constant 0 : index
    %36 = vector.load %arg9[%c0_17, %c0_18] : memref<1x1xf32, #tpu.memory_space<vmem>>, vector<1x1xf32>
    %37 = vector.broadcast %36 : vector<1x1xf32> to vector<1x256xf32>
    %38 = arith.addf %35, %37 : vector<1x256xf32>
    %c0_19 = arith.constant 0 : index
    %c0_20 = arith.constant 0 : index
    %39 = vector.load %arg10[%c0_19, %c0_20] : memref<1x256xf32, #tpu.memory_space<vmem>>, vector<1x256xf32>
    tpu.vector_store %arg10[%c0_19, %c0_20], %38 {strides = array<i32>} : memref<1x256xf32, #tpu.memory_space<vmem>>, vector<1x256xf32>,
    return
  }
  func.func @transform_0(%arg0: i32) -> (i32, i32) {
    %c0_i32 = arith.constant 0 : i32
    %c0_i32_0 = arith.constant 0 : i32
    return %c0_i32, %arg0 : i32, i32
  }
  func.func @transform_1(%arg0: i32) -> (i32, i32) {
    %c0_i32 = arith.constant 0 : i32
    %c0_i32_0 = arith.constant 0 : i32
    %c0_i32_1 = arith.constant 0 : i32
    return %c0_i32, %c0_i32_0 : i32, i32
  }
  func.func @transform_2(%arg0: i32) -> (i32, i32) {
    %c0_i32 = arith.constant 0 : i32
    %c0_i32_0 = arith.constant 0 : i32
    %c0_i32_1 = arith.constant 0 : i32
    return %c0_i32, %c0_i32_0 : i32, i32
  }
  func.func @transform_3(%arg0: i32) -> (i32, i32) {
    %c0_i32 = arith.constant 0 : i32
    %c0_i32_0 = arith.constant 0 : i32
    %c0_i32_1 = arith.constant 0 : i32
    return %c0_i32, %c0_i32_0 : i32, i32
  }
  func.func @transform_4(%arg0: i32) -> (i32, i32) {
    %c0_i32 = arith.constant 0 : i32
    %c0_i32_0 = arith.constant 0 : i32
    %c0_i32_1 = arith.constant 0 : i32
    return %c0_i32, %c0_i32_0 : i32, i32
  }
  func.func @transform_5(%arg0: i32) -> (i32, i32) {
    %c0_i32 = arith.constant 0 : i32
    %c0_i32_0 = arith.constant 0 : i32
    %c0_i32_1 = arith.constant 0 : i32
    return %c0_i32, %c0_i32_0 : i32, i32
  }
  func.func @transform_6(%arg0: i32) -> (i32, i32) {
    %c0_i32 = arith.constant 0 : i32
    %c0_i32_0 = arith.constant 0 : i32
    %c0_i32_1 = arith.constant 0 : i32
    return %c0_i32, %c0_i32_0 : i32, i32
  }
  func.func @transform_7(%arg0: i32) -> (i32, i32) {
    %c0_i32 = arith.constant 0 : i32
    %c0_i32_0 = arith.constant 0 : i32
    %c0_i32_1 = arith.constant 0 : i32
    return %c0_i32, %c0_i32_0 : i32, i32
  }
  func.func @transform_8(%arg0: i32) -> (i32, i32) {
    %c0_i32 = arith.constant 0 : i32
    %c0_i32_0 = arith.constant 0 : i32
    %c0_i32_1 = arith.constant 0 : i32
    return %c0_i32, %c0_i32_0 : i32, i32
  }
  func.func @transform_9(%arg0: i32) -> (i32, i32) {
    %c0_i32 = arith.constant 0 : i32
    %c0_i32_0 = arith.constant 0 : i32
    return %c0_i32, %arg0 : i32, i32
  }
}

</mosaic_0001>

<llo_original>
// kernel: laplace_net_forward_fm.1
$region0: #{laplace_net_forward_fm.1}
  #allocation0 [shape = 'u32[]', space=smem, size = 0x4, offset = 0x4, fixed_abs, tag = 'smem constant byte address 0x4 - core index']
  #allocation1 [shape = 'u32[144,128]{1,0:T(1,128)}', space=vmem, size = 0x12000, scoped, tag = 'internal scratch']
  #allocation2 [shape = 'f32[1,1]{1,0:T(1,128)S(1)}', space=vmem, size = 0x200, scoped, tag = 'scoped memory for laplace_net_forward_fm.1']
  %s0 = inlined_call_operand.vmem [shape: f32[2,512], index: 0, kind: input, shape index: {}]
  %s1 = inlined_call_operand.vmem [shape: f32[64,2], index: 1, kind: input, shape index: {}]
  %s2 = inlined_call_operand.vmem [shape: f32[64,1], index: 2, kind: input, shape index: {}]
  %s3 = inlined_call_operand.vmem [shape: bf16[64,64], index: 3, kind: input, shape index: {}]
  %s4 = inlined_call_operand.vmem [shape: f32[64,1], index: 4, kind: input, shape index: {}]
  %s5 = inlined_call_operand.vmem [shape: bf16[64,64], index: 5, kind: input, shape index: {}]
  %s6 = inlined_call_operand.vmem [shape: f32[64,1], index: 6, kind: input, shape index: {}]
  %s7 = inlined_call_operand.vmem [shape: f32[64,1], index: 7, kind: input, shape index: {}]
  %s8 = inlined_call_operand.<no memory space> [shape: f32[1,1], index: 8, kind: input, shape index: {}]
  %s9 = inlined_call_operand.vmem [shape: f32[1,512], index: 9, kind: output, shape index: {}]
  %s10 = sld [smem:[#allocation0]]
  $region69: #{laplace_net_forward_fm.1} parent=0
    _
  %s12 = ssub.s32 1, %s10
  %s13 = scalar_select 0, %s12, %s10
  %v14 = vstv %s8
  %15 = vst [vmem:[#allocation2] sm:$0x1] %v14
  loop: start=0, step=1, limit=4
  $region2: #{laplace_net_forward_fm.1} parent=0 // loop_pre_header
    _
  $region3: #{laplace_net_forward_fm.1} parent=0 // loop_header
    %s17 = sphi 0, %s21
    %p18 = scmp.ge.s32.totalorder %s17, 4
    %s27 = sphi 0, %s29
    %s30 = sphi 0, %s27
    %s31 = sphi 0, %s30
    %s47 = sphi 0, %s31
    %s51 = sphi 0, %s51
    %s53 = sphi 0, %s51
    %s54 = sphi 0, %s53
    %s68 = sphi 0, %s54
    %s72 = sphi 0, %s72
    %s74 = sphi 0, %s72
    %s75 = sphi 0, %s74
    %s89 = sphi 0, %s75
    %s93 = sphi 0, %s93
    %s95 = sphi 0, %s93
    %s96 = sphi 0, %s95
    %s110 = sphi 0, %s96
    %s114 = sphi 0, %s114
    %s116 = sphi 0, %s114
    %s117 = sphi 0, %s116
    %s131 = sphi 0, %s117
    %s135 = sphi 0, %s135
    %s137 = sphi 0, %s135
    %s138 = sphi 0, %s137
    %s152 = sphi 0, %s138
    %s156 = sphi 0, %s156
    %s158 = sphi 0, %s156
    %s159 = sphi 0, %s158
    %s173 = sphi 0, %s159
    %s177 = sphi 0, %s177
    %s179 = sphi 0, %s177
    %s180 = sphi 0, %s179
    %s194 = sphi 0, %s180
    %s198 = sphi 0, %s198
    %s200 = sphi 0, %s198
    %s201 = sphi 0, %s200
    %s215 = sphi 0, %s201
    %s221 = sphi 0, %s223
    %s224 = sphi 0, %s221
    %s225 = sphi 0, %s224
    %s241 = sphi 0, %s225
  $region4: #{laplace_net_forward_fm.1} parent=0 // loop_header_branch
    %20 = sbr.rel (%p18) target = $region8
  $region5: #{laplace_net_forward_fm.1} parent=0 // loop_body
    %s22 = ssub.s32 %s17, 1
    %s23 = ssub.s32 %s17, 2
    %s24 = sadd.s32 %s17, 1
    %s25 = ssub.s32 %s17, %s24
    %p26 = scmp.eq.s32.totalorder %s25, 0
    %s28 = sadd.s32 %s27, 1
    %s29 = scalar_select %p26, %s27, %s28
    %p32 = pneg %p26
    %p33 = scmp.eq.s32.totalorder %s17, 1
    %p34 = por %p32, %p33
    %p35 = scmp.ne.s32.totalorder %s27, %s30
    %p36 = scmp.eq.s32.totalorder %s17, 0
    %p37 = por %p35, %p36
    %p38 = scmp.ne.s32.totalorder %s27, %s30
    %p39 = scmp.eq.s32.totalorder %s22, 1
    %p40 = por %p38, %p39
    %p41 = scmp.ne.s32.totalorder %s30, %s31
    %p42 = scmp.eq.s32.totalorder %s22, 0
    %p43 = por %p41, %p42
    %p44 = scmp.ne.s32.totalorder %s30, %s31
    %p45 = scmp.eq.s32.totalorder %s23, 1
    %p46 = por %p44, %p45
    %p48 = scmp.ne.s32.totalorder %s31, %s47
    %p49 = scmp.eq.s32.totalorder %s23, 0
    %p50 = por %p48, %p49
    %s52 = sadd.s32 %s51, 1
    %p55 = scmp.eq.s32.totalorder %s17, 1
    %p56 = scmp.ne.s32.totalorder %s51, %s53
    %p57 = scmp.eq.s32.totalorder %s17, 0
    %p58 = por %p56, %p57
    %p59 = scmp.ne.s32.totalorder %s51, %s53
    %p60 = scmp.eq.s32.totalorder %s22, 1
    %p61 = por %p59, %p60
    %p62 = scmp.ne.s32.totalorder %s53, %s54
    %p63 = scmp.eq.s32.totalorder %s22, 0
    %p64 = por %p62, %p63
    %p65 = scmp.ne.s32.totalorder %s53, %s54
    %p66 = scmp.eq.s32.totalorder %s23, 1
    %p67 = por %p65, %p66
    %p69 = scmp.ne.s32.totalorder %s54, %s68
    %p70 = scmp.eq.s32.totalorder %s23, 0
    %p71 = por %p69, %p70
    %s73 = sadd.s32 %s72, 1
    %p76 = scmp.eq.s32.totalorder %s17, 1
    %p77 = scmp.ne.s32.totalorder %s72, %s74
    %p78 = scmp.eq.s32.totalorder %s17, 0
    %p79 = por %p77, %p78
    %p80 = scmp.ne.s32.totalorder %s72, %s74
    %p81 = scmp.eq.s32.totalorder %s22, 1
    %p82 = por %p80, %p81
    %p83 = scmp.ne.s32.totalorder %s74, %s75
    %p84 = scmp.eq.s32.totalorder %s22, 0
    %p85 = por %p83, %p84
    %p86 = scmp.ne.s32.totalorder %s74, %s75
    %p87 = scmp.eq.s32.totalorder %s23, 1
    %p88 = por %p86, %p87
    %p90 = scmp.ne.s32.totalorder %s75, %s89
    %p91 = scmp.eq.s32.totalorder %s23, 0
    %p92 = por %p90, %p91
    %s94 = sadd.s32 %s93, 1
    %p97 = scmp.eq.s32.totalorder %s17, 1
    %p98 = scmp.ne.s32.totalorder %s93, %s95
    %p99 = scmp.eq.s32.totalorder %s17, 0
    %p100 = por %p98, %p99
    %p101 = scmp.ne.s32.totalorder %s93, %s95
    %p102 = scmp.eq.s32.totalorder %s22, 1
    %p103 = por %p101, %p102
    %p104 = scmp.ne.s32.totalorder %s95, %s96
    %p105 = scmp.eq.s32.totalorder %s22, 0
    %p106 = por %p104, %p105
    %p107 = scmp.ne.s32.totalorder %s95, %s96
    %p108 = scmp.eq.s32.totalorder %s23, 1
    %p109 = por %p107, %p108
    %p111 = scmp.ne.s32.totalorder %s96, %s110
    %p112 = scmp.eq.s32.totalorder %s23, 0
    %p113 = por %p111, %p112
    %s115 = sadd.s32 %s114, 1
    %p118 = scmp.eq.s32.totalorder %s17, 1
    %p119 = scmp.ne.s32.totalorder %s114, %s116
    %p120 = scmp.eq.s32.totalorder %s17, 0
    %p121 = por %p119, %p120
    %p122 = scmp.ne.s32.totalorder %s114, %s116
    %p123 = scmp.eq.s32.totalorder %s22, 1
    %p124 = por %p122, %p123
    %p125 = scmp.ne.s32.totalorder %s116, %s117
    %p126 = scmp.eq.s32.totalorder %s22, 0
    %p127 = por %p125, %p126
    %p128 = scmp.ne.s32.totalorder %s116, %s117
    %p129 = scmp.eq.s32.totalorder %s23, 1
    %p130 = por %p128, %p129
    %p132 = scmp.ne.s32.totalorder %s117, %s131
    %p133 = scmp.eq.s32.totalorder %s23, 0
    %p134 = por %p132, %p133
    %s136 = sadd.s32 %s135, 1
    %p139 = scmp.eq.s32.totalorder %s17, 1
    %p140 = scmp.ne.s32.totalorder %s135, %s137
    %p141 = scmp.eq.s32.totalorder %s17, 0
    %p142 = por %p140, %p141
    %p143 = scmp.ne.s32.totalorder %s135, %s137
    %p144 = scmp.eq.s32.totalorder %s22, 1
    %p145 = por %p143, %p144
    %p146 = scmp.ne.s32.totalorder %s137, %s138
    %p147 = scmp.eq.s32.totalorder %s22, 0
    %p148 = por %p146, %p147
    %p149 = scmp.ne.s32.totalorder %s137, %s138
    %p150 = scmp.eq.s32.totalorder %s23, 1
    %p151 = por %p149, %p150
    %p153 = scmp.ne.s32.totalorder %s138, %s152
    %p154 = scmp.eq.s32.totalorder %s23, 0
    %p155 = por %p153, %p154
    %s157 = sadd.s32 %s156, 1
    %p160 = scmp.eq.s32.totalorder %s17, 1
    %p161 = scmp.ne.s32.totalorder %s156, %s158
    %p162 = scmp.eq.s32.totalorder %s17, 0
    %p163 = por %p161, %p162
    %p164 = scmp.ne.s32.totalorder %s156, %s158
    %p165 = scmp.eq.s32.totalorder %s22, 1
    %p166 = por %p164, %p165
    %p167 = scmp.ne.s32.totalorder %s158, %s159
    %p168 = scmp.eq.s32.totalorder %s22, 0
    %p169 = por %p167, %p168
    %p170 = scmp.ne.s32.totalorder %s158, %s159
    %p171 = scmp.eq.s32.totalorder %s23, 1
    %p172 = por %p170, %p171
    %p174 = scmp.ne.s32.totalorder %s159, %s173
    %p175 = scmp.eq.s32.totalorder %s23, 0
    %p176 = por %p174, %p175
    %s178 = sadd.s32 %s177, 1
    %p181 = scmp.eq.s32.totalorder %s17, 1
    %p182 = scmp.ne.s32.totalorder %s177, %s179
    %p183 = scmp.eq.s32.totalorder %s17, 0
    %p184 = por %p182, %p183
    %p185 = scmp.ne.s32.totalorder %s177, %s179
    %p186 = scmp.eq.s32.totalorder %s22, 1
    %p187 = por %p185, %p186
    %p188 = scmp.ne.s32.totalorder %s179, %s180
    %p189 = scmp.eq.s32.totalorder %s22, 0
    %p190 = por %p188, %p189
    %p191 = scmp.ne.s32.totalorder %s179, %s180
    %p192 = scmp.eq.s32.totalorder %s23, 1
    %p193 = por %p191, %p192
    %p195 = scmp.ne.s32.totalorder %s180, %s194
    %p196 = scmp.eq.s32.totalorder %s23, 0
    %p197 = por %p195, %p196
    %s199 = sadd.s32 %s198, 1
    %p202 = scmp.eq.s32.totalorder %s17, 1
    %p203 = scmp.ne.s32.totalorder %s198, %s200
    %p204 = scmp.eq.s32.totalorder %s17, 0
    %p205 = por %p203, %p204
    %p206 = scmp.ne.s32.totalorder %s198, %s200
    %p207 = scmp.eq.s32.totalorder %s22, 1
    %p208 = por %p206, %p207
    %p209 = scmp.ne.s32.totalorder %s200, %s201
    %p210 = scmp.eq.s32.totalorder %s22, 0
    %p211 = por %p209, %p210
    %p212 = scmp.ne.s32.totalorder %s200, %s201
    %p213 = scmp.eq.s32.totalorder %s23, 1
    %p214 = por %p212, %p213
    %p216 = scmp.ne.s32.totalorder %s201, %s215
    %p217 = scmp.eq.s32.totalorder %s23, 0
    %p218 = por %p216, %p217
    %s219 = ssub.s32 %s17, %s24
    %p220 = scmp.eq.s32.totalorder %s219, 0
    %s222 = sadd.s32 %s221, 1
    %s223 = scalar_select %p220, %s221, %s222
    %p226 = pneg %p220
    %p227 = scmp.eq.s32.totalorder %s17, 1
    %p228 = por %p226, %p227
    %p229 = scmp.ne.s32.totalorder %s221, %s224
    %p230 = scmp.eq.s32.totalorder %s17, 0
    %p231 = por %p229, %p230
    %p232 = scmp.ne.s32.totalorder %s221, %s224
    %p233 = scmp.eq.s32.totalorder %s22, 1
    %p234 = por %p232, %p233
    %p235 = scmp.ne.s32.totalorder %s224, %s225
    %p236 = scmp.eq.s32.totalorder %s22, 0
    %p237 = por %p235, %p236
    %p238 = scmp.ne.s32.totalorder %s224, %s225
    %p239 = scmp.eq.s32.totalorder %s23, 1
    %p240 = por %p238, %p239
    %p242 = scmp.ne.s32.totalorder %s225, %s241
    %p243 = scmp.eq.s32.totalorder %s23, 0
    %p244 = por %p242, %p243
    %p245 = scmp.le.s32.totalorder 1, %s17
    %p246 = scmp.lt.s32.totalorder %s17, 3
    %p247 = pnand %p245, %p246
    %p248 = pneg %p247
    // Predicated region
    $region9: #{laplace_net_forward_fm.1} parent=5 // pred_check
      _
    $region10: #{laplace_net_forward_fm.1} parent=5 // pred_check_branch
      %250 = sbr.rel (%p247) target = $region12
    $region11: #{laplace_net_forward_fm.1} parent=5 // pred_region
      %s251 = ssub.s32 %s17, 1
      // Predicated region
      $region13: #{laplace_net_forward_fm.1} parent=11 // pred_check
        %p252 = pneg %p64
      $region14: #{laplace_net_forward_fm.1} parent=11 // pred_check_branch
        %254 = sbr.rel (%p252) target = $region16
      $region15: #{laplace_net_forward_fm.1} parent=11 // pred_region
        _
      $region16: #{laplace_net_forward_fm.1} parent=11 // pred_fallthru
        _
      // Predicated region
      $region17: #{laplace_net_forward_fm.1} parent=11 // pred_check
        %p255 = pneg %p85
      $region18: #{laplace_net_forward_fm.1} parent=11 // pred_check_branch
        %257 = sbr.rel (%p255) target = $region20
      $region19: #{laplace_net_forward_fm.1} parent=11 // pred_region
        _
      $region20: #{laplace_net_forward_fm.1} parent=11 // pred_fallthru
        _
      // Predicated region
      $region21: #{laplace_net_forward_fm.1} parent=11 // pred_check
        %p258 = pneg %p106
      $region22: #{laplace_net_forward_fm.1} parent=11 // pred_check_branch
        %260 = sbr.rel (%p258) target = $region24
      $region23: #{laplace_net_forward_fm.1} parent=11 // pred_region
        _
      $region24: #{laplace_net_forward_fm.1} parent=11 // pred_fallthru
        _
      // Predicated region
      $region25: #{laplace_net_forward_fm.1} parent=11 // pred_check
        %p261 = pneg %p127
      $region26: #{laplace_net_forward_fm.1} parent=11 // pred_check_branch
        %263 = sbr.rel (%p261) target = $region28
      $region27: #{laplace_net_forward_fm.1} parent=11 // pred_region
        _
      $region28: #{laplace_net_forward_fm.1} parent=11 // pred_fallthru
        _
      // Predicated region
      $region29: #{laplace_net_forward_fm.1} parent=11 // pred_check
        %p264 = pneg %p148
      $region30: #{laplace_net_forward_fm.1} parent=11 // pred_check_branch
        %266 = sbr.rel (%p264) target = $region32
      $region31: #{laplace_net_forward_fm.1} parent=11 // pred_region
        _
      $region32: #{laplace_net_forward_fm.1} parent=11 // pred_fallthru
        _
      // Predicated region
      $region33: #{laplace_net_forward_fm.1} parent=11 // pred_check
        %p267 = pneg %p169
      $region34: #{laplace_net_forward_fm.1} parent=11 // pred_check_branch
        %269 = sbr.rel (%p267) target = $region36
      $region35: #{laplace_net_forward_fm.1} parent=11 // pred_region
        _
      $region36: #{laplace_net_forward_fm.1} parent=11 // pred_fallthru
        _
      // Predicated region
      $region37: #{laplace_net_forward_fm.1} parent=11 // pred_check
        %p270 = pneg %p190
      $region38: #{laplace_net_forward_fm.1} parent=11 // pred_check_branch
        %272 = sbr.rel (%p270) target = $region40
      $region39: #{laplace_net_forward_fm.1} parent=11 // pred_region
        _
      $region40: #{laplace_net_forward_fm.1} parent=11 // pred_fallthru
        _
      // Predicated region
      $region41: #{laplace_net_forward_fm.1} parent=11 // pred_check
        %p273 = pneg %p211
      $region42: #{laplace_net_forward_fm.1} parent=11 // pred_check_branch
        %275 = sbr.rel (%p273) target = $region44
      $region43: #{laplace_net_forward_fm.1} parent=11 // pred_region
        _
      $region44: #{laplace_net_forward_fm.1} parent=11 // pred_fallthru
        _
    $region12: #{laplace_net_forward_fm.1} parent=5 // pred_fallthru
      _
    %p276 = scmp.lt.s32.totalorder %s17, 2
    // Predicated region
    $region45: #{laplace_net_forward_fm.1} parent=5 // pred_check
      %p277 = pneg %p276
    $region46: #{laplace_net_forward_fm.1} parent=5 // pred_check_branch
      %279 = sbr.rel (%p277) target = $region48
    $region47: #{laplace_net_forward_fm.1} parent=5 // pred_region
      // Predicated region
      $region49: #{laplace_net_forward_fm.1} parent=47 // pred_check
        %p280 = pneg %p37
      $region50: #{laplace_net_forward_fm.1} parent=47 // pred_check_branch
        %282 = sbr.rel (%p280) target = $region52
      $region51: #{laplace_net_forward_fm.1} parent=47 // pred_region
        %s283 = smul.u32 2, %s17
        %p284 = scmp.lt.s32.totalorder %s283, 3
        %s285 = scalar_select %p284, %s283, 3
        %s286 = smul.addr %s285, 2
        %s287 = scalar_lea.vmem %s0, %s286
        %s288 = smul.u32 2, %s17
      $region52: #{laplace_net_forward_fm.1} parent=47 // pred_fallthru
        _
    $region48: #{laplace_net_forward_fm.1} parent=5 // pred_fallthru
      _
    %p289 = scmp.le.s32.totalorder 1, %s17
    %p290 = scmp.lt.s32.totalorder %s17, 3
    %p291 = pnand %p289, %p290
    %p292 = pneg %p291
    // Predicated region
    $region53: #{laplace_net_forward_fm.1} parent=5 // pred_check
      _
    $region54: #{laplace_net_forward_fm.1} parent=5 // pred_check_branch
      %294 = sbr.rel (%p291) target = $region56
    $region55: #{laplace_net_forward_fm.1} parent=5 // pred_region
      %s295 = ssub.s32 %s17, 1
      %s296 = smul.u32 2, %s22
      %p297 = scmp.lt.s32.totalorder %s296, 3
      %s298 = scalar_select %p297, %s296, 3
      %s299 = smul.addr %s298, 2
      %s300 = scalar_lea.vmem %s0, %s299
      %p301 = pneg %p43
      %p302 = pneg %p40
      %p303 = pneg %p64
      %p304 = pneg %p61
      %p305 = pneg %p85
      %p306 = pneg %p82
      %p307 = pneg %p106
      %p308 = pneg %p103
      %p309 = pneg %p127
      %p310 = pneg %p124
      %p311 = pneg %p148
      %p312 = pneg %p145
      %p313 = pneg %p169
      %p314 = pneg %p166
      %p315 = pneg %p190
      %p316 = pneg %p187
      %p317 = pneg %p211
      %p318 = pneg %p208
      %p319 = pneg %p237
      %p320 = pneg %p234
      %s321 = smul.u32 2, %s22
      %p322 = scmp.lt.s32.totalorder %s321, 3
      %s323 = scalar_select %p322, %s321, 3
      %s324 = scalar_lea.vmem %s9, %s323
      %s325 = smul.u32 2, %s22
      %p326 = scmp.lt.s32.totalorder %s325, 3
      %s327 = scalar_select %p326, %s325, 3
      %s328 = smul.addr %s327, 2
      %s329 = scalar_lea.vmem %s0, %s328
      %s330 = smul.u32 2, %s22
      %s331 = smul.u32 2, %s22
      %p332 = scmp.lt.s32.totalorder %s331, 3
      %s333 = scalar_select %p332, %s331, 3
      %s334 = scalar_lea.vmem %s9, %s333
      %s335 = smul.u32 2, %s22
      %v337 = vld [vmem:[%s329] sm:$0xf]
      %v338 = vld [vmem:[%s1] sm:$0xff]
      %v339 = vld [vmem:[%s1 + $0x8] sm:$0xff]
      %v340 = vld [vmem:[%s1 + $0x10] sm:$0xff]
      %v341 = vld [vmem:[%s1 + $0x18] sm:$0xff]
      %v342 = vld [vmem:[%s1 + $0x20] sm:$0xff]
      %v343 = vld [vmem:[%s1 + $0x28] sm:$0xff]
      %v344 = vld [vmem:[%s1 + $0x30] sm:$0xff]
      %v345 = vld [vmem:[%s1 + $0x38] sm:$0xff]
      %347 = vset.pattern.permute.xlu0 0
      %348 = vperm.xlu0 %347, %v338
      %v349 = vpop.permute.xlu0 %348
      %352 = vset.pattern.permute.xlu0 0
      %353 = vperm.xlu0 %352, %v339
      %v354 = vpop.permute.xlu0 %353
      %357 = vset.pattern.permute.xlu0 0
      %358 = vperm.xlu0 %357, %v340
      %v359 = vpop.permute.xlu0 %358
      %362 = vset.pattern.permute.xlu0 0
      %363 = vperm.xlu0 %362, %v341
      %v364 = vpop.permute.xlu0 %363
      %367 = vset.pattern.permute.xlu0 0
      %368 = vperm.xlu0 %367, %v342
      %v369 = vpop.permute.xlu0 %368
      %372 = vset.pattern.permute.xlu0 0
      %373 = vperm.xlu0 %372, %v343
      %v374 = vpop.permute.xlu0 %373
      %377 = vset.pattern.permute.xlu0 0
      %378 = vperm.xlu0 %377, %v344
      %v379 = vpop.permute.xlu0 %378
      %382 = vset.pattern.permute.xlu0 0
      %383 = vperm.xlu0 %382, %v345
      %v384 = vpop.permute.xlu0 %383
      %v387 = vlaneseq
      %v388 = vshrl.u32 %v387, 7
      %v389 = vsub.s32 0, %v388
      %v390 = vrot.slane %v337, %v389
      %v391 = vlaneseq
      %v392 = vshrl.u32 %v391, 7
      %v393 = vsub.s32 2, %v392
      %v394 = vrot.slane %v337, %v393
      %v397 = vlaneseq
      %v398 = vshrl.u32 %v397, 7
      %v399 = vsub.s32 0, %v398
      %v400 = vrot.slane %v390, %v399
      %v401 = vlaneseq
      %v402 = vshrl.u32 %v401, 7
      %v403 = vsub.s32 0, %v402
      %v404 = vrot.slane %v394, %v403
      %v405 = vmul.f32 %v349, %v400
      %v406 = vmul.f32 %v349, %v404
      %v407 = vmul.f32 %v354, %v400
      %v408 = vmul.f32 %v354, %v404
      %v409 = vmul.f32 %v359, %v400
      %v410 = vmul.f32 %v359, %v404
      %v411 = vmul.f32 %v364, %v400
      %v412 = vmul.f32 %v364, %v404
      %v413 = vmul.f32 %v369, %v400
      %v414 = vmul.f32 %v369, %v404
      %v415 = vmul.f32 %v374, %v400
      %v416 = vmul.f32 %v374, %v404
      %v417 = vmul.f32 %v379, %v400
      %v418 = vmul.f32 %v379, %v404
      %v419 = vmul.f32 %v384, %v400
      %v420 = vmul.f32 %v384, %v404
      %421 = vset.pattern.permute.xlu0 1
      %422 = vperm.xlu0 %421, %v338
      %v423 = vpop.permute.xlu0 %422
      %425 = vset.pattern.permute.xlu0 1
      %426 = vperm.xlu0 %425, %v339
      %v427 = vpop.permute.xlu0 %426
      %429 = vset.pattern.permute.xlu0 1
      %430 = vperm.xlu0 %429, %v340
      %v431 = vpop.permute.xlu0 %430
      %433 = vset.pattern.permute.xlu0 1
      %434 = vperm.xlu0 %433, %v341
      %v435 = vpop.permute.xlu0 %434
      %437 = vset.pattern.permute.xlu0 1
      %438 = vperm.xlu0 %437, %v342
      %v439 = vpop.permute.xlu0 %438
      %441 = vset.pattern.permute.xlu0 1
      %442 = vperm.xlu0 %441, %v343
      %v443 = vpop.permute.xlu0 %442
      %445 = vset.pattern.permute.xlu0 1
      %446 = vperm.xlu0 %445, %v344
      %v447 = vpop.permute.xlu0 %446
      %449 = vset.pattern.permute.xlu0 1
      %450 = vperm.xlu0 %449, %v345
      %v451 = vpop.permute.xlu0 %450
      %v453 = vlaneseq
      %v454 = vshrl.u32 %v453, 7
      %v455 = vsub.s32 1, %v454
      %v456 = vrot.slane %v337, %v455
      %v457 = vlaneseq
      %v458 = vshrl.u32 %v457, 7
      %v459 = vsub.s32 3, %v458
      %v460 = vrot.slane %v337, %v459
      %v463 = vlaneseq
      %v464 = vshrl.u32 %v463, 7
      %v465 = vsub.s32 1, %v464
      %v466 = vrot.slane %v456, %v465
      %v467 = vlaneseq
      %v468 = vshrl.u32 %v467, 7
      %v469 = vsub.s32 1, %v468
      %v470 = vrot.slane %v460, %v469
      %v471 = vmul.f32 %v423, %v466
      %v472 = vmul.f32 %v423, %v470
      %v473 = vmul.f32 %v427, %v466
      %v474 = vmul.f32 %v427, %v470
      %v475 = vmul.f32 %v431, %v466
      %v476 = vmul.f32 %v431, %v470
      %v477 = vmul.f32 %v435, %v466
      %v478 = vmul.f32 %v435, %v470
      %v479 = vmul.f32 %v439, %v466
      %v480 = vmul.f32 %v439, %v470
      %v481 = vmul.f32 %v443, %v466
      %v482 = vmul.f32 %v443, %v470
      %v483 = vmul.f32 %v447, %v466
      %v484 = vmul.f32 %v447, %v470
      %v485 = vmul.f32 %v451, %v466
      %v486 = vmul.f32 %v451, %v470
      %v487 = vadd.f32 %v405, %v471
      %v488 = vadd.f32 %v406, %v472
      %v489 = vadd.f32 %v407, %v473
      %v490 = vadd.f32 %v408, %v474
      %v491 = vadd.f32 %v409, %v475
      %v492 = vadd.f32 %v410, %v476
      %v493 = vadd.f32 %v411, %v477
      %v494 = vadd.f32 %v412, %v478
      %v495 = vadd.f32 %v413, %v479
      %v496 = vadd.f32 %v414, %v480
      %v497 = vadd.f32 %v415, %v481
      %v498 = vadd.f32 %v416, %v482
      %v499 = vadd.f32 %v417, %v483
      %v500 = vadd.f32 %v418, %v484
      %v501 = vadd.f32 %v419, %v485
      %v502 = vadd.f32 %v420, %v486
      %v503 = vld [vmem:[%s2] sm:$0xff]
      %v504 = vld [vmem:[%s2 + $0x8] sm:$0xff]
      %v505 = vld [vmem:[%s2 + $0x10] sm:$0xff]
      %v506 = vld [vmem:[%s2 + $0x18] sm:$0xff]
      %v507 = vld [vmem:[%s2 + $0x20] sm:$0xff]
      %v508 = vld [vmem:[%s2 + $0x28] sm:$0xff]
      %v509 = vld [vmem:[%s2 + $0x30] sm:$0xff]
      %v510 = vld [vmem:[%s2 + $0x38] sm:$0xff]
      %512 = vset.pattern.permute.xlu0 0
      %513 = vperm.xlu0 %512, %v503
      %v514 = vpop.permute.xlu0 %513
      %517 = vset.pattern.permute.xlu0 0
      %518 = vperm.xlu0 %517, %v504
      %v519 = vpop.permute.xlu0 %518
      %522 = vset.pattern.permute.xlu0 0
      %523 = vperm.xlu0 %522, %v505
      %v524 = vpop.permute.xlu0 %523
      %527 = vset.pattern.permute.xlu0 0
      %528 = vperm.xlu0 %527, %v506
      %v529 = vpop.permute.xlu0 %528
      %532 = vset.pattern.permute.xlu0 0
      %533 = vperm.xlu0 %532, %v507
      %v534 = vpop.permute.xlu0 %533
      %537 = vset.pattern.permute.xlu0 0
      %538 = vperm.xlu0 %537, %v508
      %v539 = vpop.permute.xlu0 %538
      %542 = vset.pattern.permute.xlu0 0
      %543 = vperm.xlu0 %542, %v509
      %v544 = vpop.permute.xlu0 %543
      %547 = vset.pattern.permute.xlu0 0
      %548 = vperm.xlu0 %547, %v510
      %v549 = vpop.permute.xlu0 %548
      %v551 = vadd.f32 %v487, %v514
      %v552 = vadd.f32 %v488, %v514
      %v553 = vadd.f32 %v489, %v519
      %v554 = vadd.f32 %v490, %v519
      %v555 = vadd.f32 %v491, %v524
      %v556 = vadd.f32 %v492, %v524
      %v557 = vadd.f32 %v493, %v529
      %v558 = vadd.f32 %v494, %v529
      %v559 = vadd.f32 %v495, %v534
      %v560 = vadd.f32 %v496, %v534
      %v561 = vadd.f32 %v497, %v539
      %v562 = vadd.f32 %v498, %v539
      %v563 = vadd.f32 %v499, %v544
      %v564 = vadd.f32 %v500, %v544
      %v565 = vadd.f32 %v501, %v549
      %v566 = vadd.f32 %v502, %v549
      %v567 = vtanh.pop %v551
      %v568 = vtanh.pop %v552
      %v569 = vtanh.pop %v553
      %v570 = vtanh.pop %v554
      %v571 = vtanh.pop %v555
      %v572 = vtanh.pop %v556
      %v573 = vtanh.pop %v557
      %v574 = vtanh.pop %v558
      %v575 = vtanh.pop %v559
      %v576 = vtanh.pop %v560
      %v577 = vtanh.pop %v561
      %v578 = vtanh.pop %v562
      %v579 = vtanh.pop %v563
      %v580 = vtanh.pop %v564
      %v581 = vtanh.pop %v565
      %v582 = vtanh.pop %v566
      %v583 = vld [vmem:[%s3] sm:$0xf]
      %v584 = vld [vmem:[%s3 + $0x4] sm:$0xf]
      %v585 = vld [vmem:[%s3 + $0x8] sm:$0xf]
      %v586 = vld [vmem:[%s3 + $0xc] sm:$0xf]
      %v587 = vld [vmem:[%s3 + $0x10] sm:$0xf]
      %v588 = vld [vmem:[%s3 + $0x14] sm:$0xf]
      %v589 = vld [vmem:[%s3 + $0x18] sm:$0xf]
      %v590 = vld [vmem:[%s3 + $0x1c] sm:$0xf]
      %v591 = vpack.c.bf16 %v569, %v567
      %v592 = vpack.c.bf16 %v570, %v568
      %v593 = vpack.c.bf16 %v573, %v571
      %v594 = vpack.c.bf16 %v574, %v572
      %v595 = vpack.c.bf16 %v577, %v575
      %v596 = vpack.c.bf16 %v578, %v576
      %v597 = vpack.c.bf16 %v581, %v579
      %v598 = vpack.c.bf16 %v582, %v580
      %v599 = vld [vmem:[%s4] sm:$0xff]
      %v600 = vld [vmem:[%s4 + $0x8] sm:$0xff]
      %v601 = vld [vmem:[%s4 + $0x10] sm:$0xff]
      %v602 = vld [vmem:[%s4 + $0x18] sm:$0xff]
      %v603 = vld [vmem:[%s4 + $0x20] sm:$0xff]
      %v604 = vld [vmem:[%s4 + $0x28] sm:$0xff]
      %v605 = vld [vmem:[%s4 + $0x30] sm:$0xff]
      %v606 = vld [vmem:[%s4 + $0x38] sm:$0xff]
      %608 = vset.pattern.permute.xlu0 0
      %609 = vperm.xlu0 %608, %v599
      %v610 = vpop.permute.xlu0 %609
      %613 = vset.pattern.permute.xlu0 0
      %614 = vperm.xlu0 %613, %v600
      %v615 = vpop.permute.xlu0 %614
      %618 = vset.pattern.permute.xlu0 0
      %619 = vperm.xlu0 %618, %v601
      %v620 = vpop.permute.xlu0 %619
      %623 = vset.pattern.permute.xlu0 0
      %624 = vperm.xlu0 %623, %v602
      %v625 = vpop.permute.xlu0 %624
      %628 = vset.pattern.permute.xlu0 0
      %629 = vperm.xlu0 %628, %v603
      %v630 = vpop.permute.xlu0 %629
      %633 = vset.pattern.permute.xlu0 0
      %634 = vperm.xlu0 %633, %v604
      %v635 = vpop.permute.xlu0 %634
      %638 = vset.pattern.permute.xlu0 0
      %639 = vperm.xlu0 %638, %v605
      %v640 = vpop.permute.xlu0 %639
      %643 = vset.pattern.permute.xlu0 0
      %644 = vperm.xlu0 %643, %v606
      %v645 = vpop.permute.xlu0 %644
      %v655 = vunpack.c.l.b16 %v583
      %v656 = vunpack.c.l.b16 %v584
      %v657 = vunpack.c.l.b16 %v585
      %v658 = vunpack.c.l.b16 %v586
      %v659 = vunpack.c.l.b16 %v587
      %v660 = vunpack.c.l.b16 %v588
      %v661 = vunpack.c.l.b16 %v589
      %v662 = vunpack.c.l.b16 %v590
      %v663 = vpack.c.b16 %v656, %v655
      %v664 = vpack.c.b16 %v658, %v657
      %v665 = vpack.c.b16 %v660, %v659
      %v666 = vpack.c.b16 %v662, %v661
      %vm667 = vcmask 523264
      %v669 = vsel %vm667, %v663, 0
      %v672 = vsel %vm667, %v664, 0
      %v675 = vsel %vm667, %v665, 0
      %v678 = vsel %vm667, %v666, 0
      %680 = vmatprep.subr.bf16.mxu0 0
      %681 = vmatpush1.bf16.msra.mxu0 0
      %682 = vmatprep.subr.bf16.mxu0 0
      %683 = vmatpush1.bf16.msra.mxu0 0
      %684 = vmatprep.subr.bf16.mxu0 0
      %685 = vmatpush1.bf16.msra.mxu0 0
      %686 = vmatprep.subr.bf16.mxu0 0
      %687 = vmatpush1.bf16.msra.mxu0 0
      %688 = vmatprep.subr.bf16.mxu0 %v598
      %689 = vmatpush1.bf16.msra.mxu0 %v597
      %690 = vmatprep.subr.bf16.mxu0 %v596
      %691 = vmatpush1.bf16.msra.mxu0 %v595
      %692 = vmatprep.subr.bf16.mxu0 %v594
      %693 = vmatpush1.bf16.msra.mxu0 %v593
      %694 = vmatprep.subr.bf16.mxu0 %v592
      %695 = vmatpush1.bf16.msra.mxu0 %v591
      %696 = vmatprep.subr.bf16.mxu0 0
      %697 = vmatpush2.bf16.msra.mxu0 0
      %698 = vmatprep.subr.bf16.mxu0 0
      %699 = vmatpush2.bf16.msra.mxu0 0
      %700 = vmatprep.subr.bf16.mxu0 0
      %701 = vmatpush2.bf16.msra.mxu0 0
      %702 = vmatprep.subr.bf16.mxu0 0
      %703 = vmatpush2.bf16.msra.mxu0 0
      %704 = vmatprep.subr.bf16.mxu0 0
      %705 = vmatpush2.bf16.msra.mxu0 0
      %706 = vmatprep.subr.bf16.mxu0 0
      %707 = vmatpush2.bf16.msra.mxu0 0
      %708 = vmatprep.subr.bf16.mxu0 0
      %709 = vmatpush2.bf16.msra.mxu0 0
      %710 = vmatprep.subr.bf16.mxu0 0
      %711 = vmatpush2.bf16.msra.mxu0 0
      %712 = vmatprep.mubr.bf16.mxu0 0
      %713 = vmatmul.mubr.bf16.gmra.mxu0 %v669
      %v714 = vpop.f32.mrf.mxu0
      %v715 = vadd.f32 %v610, %v714
      %v716 = vpop.f32.mrf.mxu0
      %v717 = vadd.f32 %v610, %v716
      %v718 = vpop.f32.mrf.mxu0
      %v719 = vadd.f32 %v615, %v718
      %v720 = vpop.f32.mrf.mxu0
      %v721 = vadd.f32 %v615, %v720
      %722 = vmatprep.mubr.bf16.mxu0 0
      %723 = vmatmul.mubr.bf16.gmra.mxu0 %v672
      %v724 = vpop.f32.mrf.mxu0
      %v725 = vadd.f32 %v620, %v724
      %v726 = vpop.f32.mrf.mxu0
      %v727 = vadd.f32 %v620, %v726
      %v728 = vpop.f32.mrf.mxu0
      %v729 = vadd.f32 %v625, %v728
      %v730 = vpop.f32.mrf.mxu0
      %v731 = vadd.f32 %v625, %v730
      %732 = vmatprep.mubr.bf16.mxu0 0
      %733 = vmatmul.mubr.bf16.gmra.mxu0 %v675
      %v734 = vpop.f32.mrf.mxu0
      %v735 = vadd.f32 %v630, %v734
      %v736 = vpop.f32.mrf.mxu0
      %v737 = vadd.f32 %v630, %v736
      %v738 = vpop.f32.mrf.mxu0
      %v739 = vadd.f32 %v635, %v738
      %v740 = vpop.f32.mrf.mxu0
      %v741 = vadd.f32 %v635, %v740
      %742 = vmatprep.mubr.bf16.mxu0 0
      %743 = vmatmul.mubr.bf16.gmra.mxu0 %v678
      %v744 = vpop.f32.mrf.mxu0
      %v745 = vadd.f32 %v640, %v744
      %v746 = vpop.f32.mrf.mxu0
      %v747 = vadd.f32 %v640, %v746
      %v748 = vpop.f32.mrf.mxu0
      %v749 = vadd.f32 %v645, %v748
      %v750 = vpop.f32.mrf.mxu0
      %v751 = vadd.f32 %v645, %v750
      %752 = vdwg.mxu0
      %v753 = vtanh.pop %v715
      %v754 = vtanh.pop %v717
      %v755 = vtanh.pop %v719
      %v756 = vtanh.pop %v721
      %v757 = vtanh.pop %v725
      %v758 = vtanh.pop %v727
      %v759 = vtanh.pop %v729
      %v760 = vtanh.pop %v731
      %v761 = vtanh.pop %v735
      %v762 = vtanh.pop %v737
      %v763 = vtanh.pop %v739
      %v764 = vtanh.pop %v741
      %v765 = vtanh.pop %v745
      %v766 = vtanh.pop %v747
      %v767 = vtanh.pop %v749
      %v768 = vtanh.pop %v751
      %v769 = vld [vmem:[%s5] sm:$0xf]
      %v770 = vld [vmem:[%s5 + $0x4] sm:$0xf]
      %v771 = vld [vmem:[%s5 + $0x8] sm:$0xf]
      %v772 = vld [vmem:[%s5 + $0xc] sm:$0xf]
      %v773 = vld [vmem:[%s5 + $0x10] sm:$0xf]
      %v774 = vld [vmem:[%s5 + $0x14] sm:$0xf]
      %v775 = vld [vmem:[%s5 + $0x18] sm:$0xf]
      %v776 = vld [vmem:[%s5 + $0x1c] sm:$0xf]
      %v777 = vpack.c.bf16 %v755, %v753
      %v778 = vpack.c.bf16 %v756, %v754
      %v779 = vpack.c.bf16 %v759, %v757
      %v780 = vpack.c.bf16 %v760, %v758
      %v781 = vpack.c.bf16 %v763, %v761
      %v782 = vpack.c.bf16 %v764, %v762
      %v783 = vpack.c.bf16 %v767, %v765
      %v784 = vpack.c.bf16 %v768, %v766
      %v785 = vld [vmem:[%s6] sm:$0xff]
      %v786 = vld [vmem:[%s6 + $0x8] sm:$0xff]
      %v787 = vld [vmem:[%s6 + $0x10] sm:$0xff]
      %v788 = vld [vmem:[%s6 + $0x18] sm:$0xff]
      %v789 = vld [vmem:[%s6 + $0x20] sm:$0xff]
      %v790 = vld [vmem:[%s6 + $0x28] sm:$0xff]
      %v791 = vld [vmem:[%s6 + $0x30] sm:$0xff]
      %v792 = vld [vmem:[%s6 + $0x38] sm:$0xff]
      %794 = vset.pattern.permute.xlu0 0
      %795 = vperm.xlu0 %794, %v785
      %v796 = vpop.permute.xlu0 %795
      %799 = vset.pattern.permute.xlu0 0
      %800 = vperm.xlu0 %799, %v786
      %v801 = vpop.permute.xlu0 %800
      %804 = vset.pattern.permute.xlu0 0
      %805 = vperm.xlu0 %804, %v787
      %v806 = vpop.permute.xlu0 %805
      %809 = vset.pattern.permute.xlu0 0
      %810 = vperm.xlu0 %809, %v788
      %v811 = vpop.permute.xlu0 %810
      %814 = vset.pattern.permute.xlu0 0
      %815 = vperm.xlu0 %814, %v789
      %v816 = vpop.permute.xlu0 %815
      %819 = vset.pattern.permute.xlu0 0
      %820 = vperm.xlu0 %819, %v790
      %v821 = vpop.permute.xlu0 %820
      %824 = vset.pattern.permute.xlu0 0
      %825 = vperm.xlu0 %824, %v791
      %v826 = vpop.permute.xlu0 %825
      %829 = vset.pattern.permute.xlu0 0
      %830 = vperm.xlu0 %829, %v792
      %v831 = vpop.permute.xlu0 %830
      %v841 = vunpack.c.l.b16 %v769
      %v842 = vunpack.c.l.b16 %v770
      %v843 = vunpack.c.l.b16 %v771
      %v844 = vunpack.c.l.b16 %v772
      %v845 = vunpack.c.l.b16 %v773
      %v846 = vunpack.c.l.b16 %v774
      %v847 = vunpack.c.l.b16 %v775
      %v848 = vunpack.c.l.b16 %v776
      %v849 = vpack.c.b16 %v842, %v841
      %v850 = vpack.c.b16 %v844, %v843
      %v851 = vpack.c.b16 %v846, %v845
      %v852 = vpack.c.b16 %v848, %v847
      %v854 = vsel %vm667, %v849, 0
      %v857 = vsel %vm667, %v850, 0
      %v860 = vsel %vm667, %v851, 0
      %v863 = vsel %vm667, %v852, 0
      %865 = vmatprep.subr.bf16.mxu0 0
      %866 = vmatpush1.bf16.msra.mxu0 0
      %867 = vmatprep.subr.bf16.mxu0 0
      %868 = vmatpush1.bf16.msra.mxu0 0
      %869 = vmatprep.subr.bf16.mxu0 0
      %870 = vmatpush1.bf16.msra.mxu0 0
      %871 = vmatprep.subr.bf16.mxu0 0
      %872 = vmatpush1.bf16.msra.mxu0 0
      %873 = vmatprep.subr.bf16.mxu0 %v784
      %874 = vmatpush1.bf16.msra.mxu0 %v783
      %875 = vmatprep.subr.bf16.mxu0 %v782
      %876 = vmatpush1.bf16.msra.mxu0 %v781
      %877 = vmatprep.subr.bf16.mxu0 %v780
      %878 = vmatpush1.bf16.msra.mxu0 %v779
      %879 = vmatprep.subr.bf16.mxu0 %v778
      %880 = vmatpush1.bf16.msra.mxu0 %v777
      %881 = vmatprep.subr.bf16.mxu0 0
      %882 = vmatpush2.bf16.msra.mxu0 0
      %883 = vmatprep.subr.bf16.mxu0 0
      %884 = vmatpush2.bf16.msra.mxu0 0
      %885 = vmatprep.subr.bf16.mxu0 0
      %886 = vmatpush2.bf16.msra.mxu0 0
      %887 = vmatprep.subr.bf16.mxu0 0
      %888 = vmatpush2.bf16.msra.mxu0 0
      %889 = vmatprep.subr.bf16.mxu0 0
      %890 = vmatpush2.bf16.msra.mxu0 0
      %891 = vmatprep.subr.bf16.mxu0 0
      %892 = vmatpush2.bf16.msra.mxu0 0
      %893 = vmatprep.subr.bf16.mxu0 0
      %894 = vmatpush2.bf16.msra.mxu0 0
      %895 = vmatprep.subr.bf16.mxu0 0
      %896 = vmatpush2.bf16.msra.mxu0 0
      %897 = vmatprep.mubr.bf16.mxu0 0
      %898 = vmatmul.mubr.bf16.gmra.mxu0 %v854
      %v899 = vpop.f32.mrf.mxu0
      %v900 = vadd.f32 %v796, %v899
      %v901 = vpop.f32.mrf.mxu0
      %v902 = vadd.f32 %v796, %v901
      %v903 = vpop.f32.mrf.mxu0
      %v904 = vadd.f32 %v801, %v903
      %v905 = vpop.f32.mrf.mxu0
      %v906 = vadd.f32 %v801, %v905
      %907 = vmatprep.mubr.bf16.mxu0 0
      %908 = vmatmul.mubr.bf16.gmra.mxu0 %v857
      %v909 = vpop.f32.mrf.mxu0
      %v910 = vadd.f32 %v806, %v909
      %v911 = vpop.f32.mrf.mxu0
      %v912 = vadd.f32 %v806, %v911
      %v913 = vpop.f32.mrf.mxu0
      %v914 = vadd.f32 %v811, %v913
      %v915 = vpop.f32.mrf.mxu0
      %v916 = vadd.f32 %v811, %v915
      %917 = vmatprep.mubr.bf16.mxu0 0
      %918 = vmatmul.mubr.bf16.gmra.mxu0 %v860
      %v919 = vpop.f32.mrf.mxu0
      %v920 = vadd.f32 %v816, %v919
      %v921 = vpop.f32.mrf.mxu0
      %v922 = vadd.f32 %v816, %v921
      %v923 = vpop.f32.mrf.mxu0
      %v924 = vadd.f32 %v821, %v923
      %v925 = vpop.f32.mrf.mxu0
      %v926 = vadd.f32 %v821, %v925
      %927 = vmatprep.mubr.bf16.mxu0 0
      %928 = vmatmul.mubr.bf16.gmra.mxu0 %v863
      %v929 = vpop.f32.mrf.mxu0
      %v930 = vadd.f32 %v826, %v929
      %v931 = vpop.f32.mrf.mxu0
      %v932 = vadd.f32 %v826, %v931
      %v933 = vpop.f32.mrf.mxu0
      %v934 = vadd.f32 %v831, %v933
      %v935 = vpop.f32.mrf.mxu0
      %v936 = vadd.f32 %v831, %v935
      %937 = vdwg.mxu0
      %v938 = vtanh.pop %v900
      %v939 = vtanh.pop %v902
      %v940 = vtanh.pop %v904
      %v941 = vtanh.pop %v906
      %v942 = vtanh.pop %v910
      %v943 = vtanh.pop %v912
      %v944 = vtanh.pop %v914
      %v945 = vtanh.pop %v916
      %v946 = vtanh.pop %v920
      %v947 = vtanh.pop %v922
      %v948 = vtanh.pop %v924
      %v949 = vtanh.pop %v926
      %v950 = vtanh.pop %v930
      %v951 = vtanh.pop %v932
      %v952 = vtanh.pop %v934
      %v953 = vtanh.pop %v936
      %v954 = vld [vmem:[%s7] sm:$0xff]
      %v955 = vld [vmem:[%s7 + $0x8] sm:$0xff]
      %v956 = vld [vmem:[%s7 + $0x10] sm:$0xff]
      %v957 = vld [vmem:[%s7 + $0x18] sm:$0xff]
      %v958 = vld [vmem:[%s7 + $0x20] sm:$0xff]
      %v959 = vld [vmem:[%s7 + $0x28] sm:$0xff]
      %v960 = vld [vmem:[%s7 + $0x30] sm:$0xff]
      %v961 = vld [vmem:[%s7 + $0x38] sm:$0xff]
      %963 = vset.pattern.permute.xlu0 0
      %964 = vperm.xlu0 %963, %v954
      %v965 = vpop.permute.xlu0 %964
      %968 = vset.pattern.permute.xlu0 0
      %969 = vperm.xlu0 %968, %v955
      %v970 = vpop.permute.xlu0 %969
      %973 = vset.pattern.permute.xlu0 0
      %974 = vperm.xlu0 %973, %v956
      %v975 = vpop.permute.xlu0 %974
      %978 = vset.pattern.permute.xlu0 0
      %979 = vperm.xlu0 %978, %v957
      %v980 = vpop.permute.xlu0 %979
      %983 = vset.pattern.permute.xlu0 0
      %984 = vperm.xlu0 %983, %v958
      %v985 = vpop.permute.xlu0 %984
      %988 = vset.pattern.permute.xlu0 0
      %989 = vperm.xlu0 %988, %v959
      %v990 = vpop.permute.xlu0 %989
      %993 = vset.pattern.permute.xlu0 0
      %994 = vperm.xlu0 %993, %v960
      %v995 = vpop.permute.xlu0 %994
      %998 = vset.pattern.permute.xlu0 0
      %999 = vperm.xlu0 %998, %v961
      %v1000 = vpop.permute.xlu0 %999
      %v1002 = vmul.f32 %v965, %v938
      %v1003 = vmul.f32 %v965, %v939
      %v1004 = vmul.f32 %v970, %v940
      %v1005 = vmul.f32 %v970, %v941
      %v1006 = vmul.f32 %v975, %v942
      %v1007 = vmul.f32 %v975, %v943
      %v1008 = vmul.f32 %v980, %v944
      %v1009 = vmul.f32 %v980, %v945
      %v1010 = vmul.f32 %v985, %v946
      %v1011 = vmul.f32 %v985, %v947
      %v1012 = vmul.f32 %v990, %v948
      %v1013 = vmul.f32 %v990, %v949
      %v1014 = vmul.f32 %v995, %v950
      %v1015 = vmul.f32 %v995, %v951
      %v1016 = vmul.f32 %v1000, %v952
      %v1017 = vmul.f32 %v1000, %v953
      %v1018 = vadd.f32 %v1002, %v1004
      %v1019 = vadd.f32 %v1018, %v1006
      %v1020 = vadd.f32 %v1019, %v1008
      %v1021 = vadd.f32 %v1020, %v1010
      %v1022 = vadd.f32 %v1021, %v1012
      %v1023 = vadd.f32 %v1022, %v1014
      %v1024 = vadd.f32 %v1023, %v1016
      %v1025 = vrot.slane %v1024, 4
      %v1026 = vadd.f32 %v1024, %v1025
      %v1027 = vrot.slane %v1026, 2
      %v1028 = vadd.f32 %v1026, %v1027
      %v1029 = vrot.slane %v1028, 1
      %v1030 = vadd.f32 %v1028, %v1029
      %v1031 = vadd.f32 %v1003, %v1005
      %v1032 = vadd.f32 %v1031, %v1007
      %v1033 = vadd.f32 %v1032, %v1009
      %v1034 = vadd.f32 %v1033, %v1011
      %v1035 = vadd.f32 %v1034, %v1013
      %v1036 = vadd.f32 %v1035, %v1015
      %v1037 = vadd.f32 %v1036, %v1017
      %v1038 = vrot.slane %v1037, 4
      %v1039 = vadd.f32 %v1037, %v1038
      %v1040 = vrot.slane %v1039, 2
      %v1041 = vadd.f32 %v1039, %v1040
      %v1042 = vrot.slane %v1041, 1
      %v1043 = vadd.f32 %v1041, %v1042
      %v1044 = vld [vmem:[#allocation2] sm:$0x1]
      %1046 = vset.pattern.permute.xlu0 0
      %1047 = vperm.xlu0 %1046, %v1044
      %v1048 = vpop.permute.xlu0 %1047
      %v1050 = vlaneseq
      %v1051 = vshrl.u32 %v1050, 7
      %v1052 = vsub.s32 0, %v1051
      %v1053 = vrot.slane %v1048, %v1052
      %v1054 = vadd.f32 %v1030, %v1053
      %v1055 = vadd.f32 %v1043, %v1053
      %v1058 = vcombine.low %v1054, %v1055
      %v1060 = vunpack.c.l.s4 1966171168
      %v1061 = vunpack.c.0.s8 %v1060
      %v1062 = vlaneseq
      %v1063 = vshrl.u32 %v1062, 7
      %v1064 = vsub.s32 %v1061, %v1063
      %v1065 = vrot.slane %v1058, %v1064
      %v1067 = vunpack.c.l.s4 1966171168
      %v1068 = vunpack.c.0.s8 %v1067
      %v1069 = vlaneseq
      %v1070 = vshrl.u32 %v1069, 7
      %v1071 = vsub.s32 %v1068, %v1070
      %v1072 = vrot.slane %v1065, %v1071
      %v1074 = vlaneseq
      %vm1075 = vcmp.ge.s32.totalorder %v1074, 0
      %vm1076 = vcmp.lt.s32.totalorder %v1074, 256
      %vm1077 = vmand %vm1075, %vm1076
      %1078 = vst.msk [vmem:[%s334] sm:$0x3] %vm1077, %v1072
      %s1079 = smul.u32 2, %s22
      %p1080 = scmp.lt.s32.totalorder %s1079, 3
      %s1081 = scalar_select %p1080, %s1079, 3
      %s1082 = scalar_lea.vmem %s9, %s1081
      // Predicated region
      $region57: #{laplace_net_forward_fm.1} parent=55 // pred_check
        %p1083 = pneg %p234
      $region58: #{laplace_net_forward_fm.1} parent=55 // pred_check_branch
        %1085 = sbr.rel (%p1083) target = $region60
      $region59: #{laplace_net_forward_fm.1} parent=55 // pred_region
        %s1086 = smul.u32 2, %s22
      $region60: #{laplace_net_forward_fm.1} parent=55 // pred_fallthru
        _
    $region56: #{laplace_net_forward_fm.1} parent=5 // pred_fallthru
      _
    %p1087 = scmp.le.s32.totalorder 2, %s17
    // Predicated region
    $region61: #{laplace_net_forward_fm.1} parent=5 // pred_check
      %p1088 = pneg %p1087
    $region62: #{laplace_net_forward_fm.1} parent=5 // pred_check_branch
      %1090 = sbr.rel (%p1088) target = $region64
    $region63: #{laplace_net_forward_fm.1} parent=5 // pred_region
      %s1091 = ssub.s32 %s17, 2
      // Predicated region
      $region65: #{laplace_net_forward_fm.1} parent=63 // pred_check
        %p1092 = pneg %p240
      $region66: #{laplace_net_forward_fm.1} parent=63 // pred_check_branch
        %1094 = sbr.rel (%p1092) target = $region68
      $region67: #{laplace_net_forward_fm.1} parent=63 // pred_region
        %s1095 = smul.u32 2, %s23
        %p1096 = scmp.lt.s32.totalorder %s1095, 3
        %s1097 = scalar_select %p1096, %s1095, 3
        %s1098 = scalar_lea.vmem %s9, %s1097
      $region68: #{laplace_net_forward_fm.1} parent=63 // pred_fallthru
        _
    $region64: #{laplace_net_forward_fm.1} parent=5 // pred_fallthru
      _
  $region6: #{laplace_net_forward_fm.1} parent=0 // loop_footer
    %s21 = sadd.s32 1, %s17
  $region7: #{laplace_net_forward_fm.1} parent=0 // loop_footer_branch
    %16 = sbr.rel target = $region3
  $region8: #{laplace_net_forward_fm.1} parent=0 // loop_exit
    _

</llo_original>
